<compile_context>
chip_gen: v7x
topology: tpu7x:2x2x1
jax: 0.10.0
libtpu: 0.0.40
codegen_flags: <defaults>
</compile_context>

<pallas_src>
import functools

import jax
import jax.numpy as jnp
from jax.experimental import pallas as pl
from jax.experimental.pallas import tpu as pltpu


def _round_up(x, m):
    return -(-x // m) * m


def _binary_focal_loss_kernel(x_ref, t_ref, out_ref, *, gamma, alpha,
                              block_rows, tiles_per_split, m_valid, need_mask):
    c = pl.program_id(0)   # core-split axis ("parallel")
    j = pl.program_id(1)   # row-tile axis ("arbitrary", accumulated)

    @pl.when(j == 0)
    def _():
        out_ref[...] = jnp.zeros_like(out_ref)

    x = x_ref[...].astype(jnp.float32)
    t = t_ref[...].astype(jnp.float32)

    # Shared-exp sigmoid / log-sigmoid: one exp, one log, one divide on the EUP
    # (instead of sigmoid + two logs = ~4 EUP ops per element).
    e = jnp.exp(-jnp.abs(x))              # exp(-|x|)
    log1pe = jnp.log(1.0 + e)             # log(1 + exp(-|x|))  (softplus(-|x|))
    r = 1.0 / (1.0 + e)
    p = jnp.where(x >= 0.0, r, e * r)     # sigmoid(x), stable formulation

    # log(sigmoid(x)) and log(1 - sigmoid(x)), analytically stable.
    log_p = jnp.minimum(x, 0.0) - log1pe
    log_1mp = -jnp.maximum(x, 0.0) - log1pe
    # F.binary_cross_entropy clamps its log terms at -100. Also reproduce the
    # f32 sigmoid saturation of the PyTorch path: when p rounds to exactly 1.0,
    # log(1 - p) -> log(0) -> -inf -> clamped to -100.
    log_p = jnp.maximum(log_p, -100.0)
    log_1mp = jnp.maximum(log_1mp, -100.0)
    log_1mp = jnp.where(p >= 1.0, -100.0, log_1mp)

    bce = -(t * log_p + (1.0 - t) * log_1mp)

    base = (1.0 - p) * t + p * (1.0 - t)
    if gamma == 2:
        factor = base * base
    elif gamma == 1:
        factor = base
    else:
        factor = base ** gamma
    if alpha is not None:
        factor = (alpha * t + (1.0 - alpha) * (1.0 - t)) * factor

    loss = bce * factor

    if need_mask:
        # Zero out padded tail rows so they do not bias the sum.
        row = jax.lax.broadcasted_iota(jnp.int32, loss.shape, 0)
        global_row = (c * tiles_per_split + j) * block_rows + row
        loss = jnp.where(global_row < m_valid, loss, 0.0)

    # Fold rows into an (8, N) partial: pure VPU adds each step. The single
    # cross-lane/sublane reduction (and the mean divide) happens once, outside
    # the kernel, on the tiny partial-sum output.
    partial = loss.reshape(block_rows // 8, 8, loss.shape[-1]).sum(axis=0)
    out_ref[...] += partial


def binary_focal_loss(logits, target, *, gamma=2, alpha=None,
                      reduction="mean", block_rows=None, num_splits=2):
    """Focal BCE loss. logits/target: [M, N] (flatten leading dims first).

    logits may be f32 or bf16; target may be float or int8/bool {0,1} — both
    are upcast to f32 inside the kernel (narrower dtypes halve HBM traffic).
    """
    assert logits.shape == target.shape
    assert logits.ndim == 2, "layout: flatten leading dims to [M, N] first"
    if reduction not in ("mean", "sum"):
        # TODO(synk): reduction='none' (per-element output) and pos_weight are
        # not implemented (F.binary_cross_entropy does not accept pos_weight).
        raise NotImplementedError(f"reduction={reduction!r} not supported")
    M, N = logits.shape

    if block_rows is None:
        # ~2 MiB per f32 input tile -> with 2 inputs x 2 pipeline buffers this
        # stays well inside the default scoped-VMEM limit on v5e/v6e/v7x.
        block_rows = max(8, min(1024, (2 * 1024 * 1024) // (N * 4)))
    block_rows = min(block_rows, _round_up(M, 8))
    block_rows = max(8, _round_up(block_rows, 8))

    tiles_total = pl.cdiv(M, block_rows)
    num_splits = max(1, min(num_splits, tiles_total))   # >1 uses both v7x TCs
    tiles_per_split = pl.cdiv(tiles_total, num_splits)
    m_pad = num_splits * tiles_per_split * block_rows

    if m_pad != M:
        pad = m_pad - M
        logits = jnp.pad(logits, ((0, pad), (0, 0)))
        target = jnp.pad(target, ((0, pad), (0, 0)))

    kernel = functools.partial(
        _binary_focal_loss_kernel,
        gamma=gamma, alpha=alpha, block_rows=block_rows,
        tiles_per_split=tiles_per_split, m_valid=M, need_mask=(m_pad != M))

    partials = pl.pallas_call(
        kernel,
        out_shape=jax.ShapeDtypeStruct((num_splits, 8, N), jnp.float32),
        grid_spec=pltpu.PrefetchScalarGridSpec(
            num_scalar_prefetch=0,
            grid=(num_splits, tiles_per_split),
            in_specs=[
                pl.BlockSpec((block_rows, N),
                             lambda c, j: (c * tiles_per_split + j, 0)),
                pl.BlockSpec((block_rows, N),
                             lambda c, j: (c * tiles_per_split + j, 0)),
            ],
            out_specs=pl.BlockSpec((None, 8, N), lambda c, j: (c, 0, 0)),
        ),
        compiler_params=pltpu.CompilerParams(
            dimension_semantics=("parallel", "arbitrary")),
    )(logits, target)

    total = jnp.sum(partials)          # tiny final reduce over num_splits*8*N
    if reduction == "mean":
        return total / (M * N)
    return total                       # "sum"


def _reference(logits, target, gamma=2, alpha=None):
    x = logits.astype(jnp.float32)
    t = target.astype(jnp.float32)
    p = jax.nn.sigmoid(x)
    factor = ((1 - p) * t + p * (1 - t)) ** gamma
    if alpha is not None:
        factor = (alpha * t + (1 - alpha) * (1 - t)) * factor
    bce = -(t * jnp.maximum(jnp.log(p), -100.0)
            + (1 - t) * jnp.maximum(jnp.log(1 - p), -100.0))
    return jnp.mean(bce * factor)


if __name__ == "__main__":
    key = jax.random.PRNGKey(0)
    k1, k2, k3, k4 = jax.random.split(key, 4)

    # Case 1: batch=2, seq=8 -> M=16 rows, N=128 lanes, f32, default config.
    M, N = 16, 128
    logits = jax.random.normal(k1, (M, N), jnp.float32) * 3.0
    target = jax.random.bernoulli(k2, 0.3, (M, N)).astype(jnp.float32)
    out = jax.block_until_ready(binary_focal_loss(logits, target))
    ref = _reference(logits, target)
    assert jnp.allclose(out, ref, rtol=1e-5, atol=1e-5), (out, ref)

    # Case 2: ragged M (exercises the tail-mask path) + alpha weighting.
    M2 = 20
    logits2 = jax.random.normal(k3, (M2, N), jnp.float32) * 3.0
    target2 = jax.random.bernoulli(k4, 0.3, (M2, N)).astype(jnp.float32)
    out2 = jax.block_until_ready(binary_focal_loss(logits2, target2, alpha=0.25))
    ref2 = _reference(logits2, target2, alpha=0.25)
    assert jnp.allclose(out2, ref2, rtol=1e-5, atol=1e-5), (out2, ref2)

    # Case 3: multi-tile grid + 2-way split (both TCs on v7x) + narrow dtypes
    # (bf16 logits, int8 {0,1} targets) + reduction='sum'.
    M3 = 64
    logits3 = (jax.random.normal(k1, (M3, N), jnp.float32) * 3.0).astype(jnp.bfloat16)
    target3 = jax.random.bernoulli(k2, 0.3, (M3, N)).astype(jnp.int8)
    out3 = jax.block_until_ready(
        binary_focal_loss(logits3, target3, reduction="sum",
                          block_rows=32, num_splits=2))
    ref3 = _reference(logits3, target3) * (M3 * N)   # sum = mean * count
    assert jnp.allclose(out3, ref3, rtol=1e-4, atol=1e-3), (out3, ref3)

    print("KERNEL_OK")
</pallas_src>

<mosaic_0001>
module attributes {stable_mosaic.version = 11 : i64} {
  func.func @_binary_focal_loss_kernel(%arg0: i32, %arg1: i32, %arg2: memref<16x128xf32, #tpu.memory_space<vmem>>, %arg3: memref<16x128xf32, #tpu.memory_space<vmem>>, %arg4: memref<1x8x128xf32, #tpu.memory_space<vmem>>) attributes {dimension_semantics = [#tpu.dimension_semantics<parallel>, #tpu.dimension_semantics<arbitrary>], iteration_bounds = array<i64: 1, 1>, scalar_prefetch = 0 : i64, scratch_operands = 0 : i64, tpu.core_type = #tpu.core_type<tc>, window_params = [{transform_indices = @transform_0, window_bounds = array<i64: 16, 128>}, {transform_indices = @transform_1, window_bounds = array<i64: 16, 128>}, {transform_indices = @transform_2, window_bounds = array<i64: 1, 8, 128>}]} {
    %c0_i32 = arith.constant 0 : i32
    %0 = arith.cmpi eq, %arg1, %c0_i32 : i32
    %1 = arith.extui %0 : i1 to i32
    %c0_i32_0 = arith.constant 0 : i32
    %2 = arith.cmpi ne, %1, %c0_i32_0 : i32
    scf.if %2 {
      %cst_26 = arith.constant 0.000000e+00 : f32
      %60 = vector.broadcast %cst_26 : f32 to vector<8x128xf32>
      %c0_27 = arith.constant 0 : index
      %c0_28 = arith.constant 0 : index
      %c0_29 = arith.constant 0 : index
      %61 = vector.load %arg4[%c0_27, %c0_28, %c0_29] : memref<1x8x128xf32, #tpu.memory_space<vmem>>, vector<1x8x128xf32>
      %62 = vector.shape_cast %61 : vector<1x8x128xf32> to vector<8x128xf32>
      %63 = vector.shape_cast %60 : vector<8x128xf32> to vector<1x8x128xf32>
      tpu.vector_store %arg4[%c0_27, %c0_28, %c0_29], %63 {strides = array<i32>} : memref<1x8x128xf32, #tpu.memory_space<vmem>>, vector<1x8x128xf32>,
    } else {
    }
    %c0 = arith.constant 0 : index
    %c0_1 = arith.constant 0 : index
    %3 = vector.load %arg2[%c0, %c0_1] : memref<16x128xf32, #tpu.memory_space<vmem>>, vector<16x128xf32>
    %c0_2 = arith.constant 0 : index
    %c0_3 = arith.constant 0 : index
    %4 = vector.load %arg3[%c0_2, %c0_3] : memref<16x128xf32, #tpu.memory_space<vmem>>, vector<16x128xf32>
    %5 = math.absf %3 : vector<16x128xf32>
    %cst = arith.constant 0.000000e+00 : f32
    %6 = vector.broadcast %cst : f32 to vector<16x128xf32>
    %7 = arith.subf %6, %5 : vector<16x128xf32>
    %8 = math.exp %7 : vector<16x128xf32>
    %cst_4 = arith.constant 1.000000e+00 : f32
    %9 = vector.broadcast %cst_4 : f32 to vector<16x128xf32>
    %10 = arith.addf %9, %8 : vector<16x128xf32>
    %11 = math.log %10 : vector<16x128xf32>
    %cst_5 = arith.constant 1.000000e+00 : f32
    %12 = vector.broadcast %cst_5 : f32 to vector<16x128xf32>
    %13 = arith.addf %12, %8 : vector<16x128xf32>
    %cst_6 = arith.constant 1.000000e+00 : f32
    %14 = vector.broadcast %cst_6 : f32 to vector<16x128xf32>
    %15 = arith.divf %14, %13 : vector<16x128xf32>
    %cst_7 = arith.constant 0.000000e+00 : f32
    %16 = vector.broadcast %cst_7 : f32 to vector<16x128xf32>
    %17 = arith.cmpf oge, %3, %16 : vector<16x128xf32>
    %18 = arith.mulf %8, %15 : vector<16x128xf32>
    %19 = arith.select %17, %15, %18 : vector<16x128xi1>, vector<16x128xf32>
    %cst_8 = arith.constant 0.000000e+00 : f32
    %20 = vector.broadcast %cst_8 : f32 to vector<16x128xf32>
    %21 = arith.minimumf %3, %20 : vector<16x128xf32>
    %22 = arith.subf %21, %11 : vector<16x128xf32>
    %cst_9 = arith.constant 0.000000e+00 : f32
    %23 = vector.broadcast %cst_9 : f32 to vector<16x128xf32>
    %24 = arith.maximumf %3, %23 : vector<16x128xf32>
    %cst_10 = arith.constant 0.000000e+00 : f32
    %25 = vector.broadcast %cst_10 : f32 to vector<16x128xf32>
    %26 = arith.subf %25, %24 : vector<16x128xf32>
    %27 = arith.subf %26, %11 : vector<16x128xf32>
    %cst_11 = arith.constant -1.000000e+02 : f32
    %28 = vector.broadcast %cst_11 : f32 to vector<16x128xf32>
    %29 = arith.maximumf %22, %28 : vector<16x128xf32>
    %cst_12 = arith.constant -1.000000e+02 : f32
    %30 = vector.broadcast %cst_12 : f32 to vector<16x128xf32>
    %31 = arith.maximumf %27, %30 : vector<16x128xf32>
    %cst_13 = arith.constant 1.000000e+00 : f32
    %32 = vector.broadcast %cst_13 : f32 to vector<16x128xf32>
    %33 = arith.cmpf oge, %19, %32 : vector<16x128xf32>
    %cst_14 = arith.constant -1.000000e+02 : f32
    %34 = vector.broadcast %cst_14 : f32 to vector<16x128xf32>
    %35 = arith.select %33, %34, %31 : vector<16x128xi1>, vector<16x128xf32>
    %36 = arith.mulf %4, %29 : vector<16x128xf32>
    %cst_15 = arith.constant 1.000000e+00 : f32
    %37 = vector.broadcast %cst_15 : f32 to vector<16x128xf32>
    %38 = arith.subf %37, %4 : vector<16x128xf32>
    %39 = arith.mulf %38, %35 : vector<16x128xf32>
    %40 = arith.addf %36, %39 : vector<16x128xf32>
    %cst_16 = arith.constant 0.000000e+00 : f32
    %41 = vector.broadcast %cst_16 : f32 to vector<16x128xf32>
    %42 = arith.subf %41, %40 : vector<16x128xf32>
    %cst_17 = arith.constant 1.000000e+00 : f32
    %43 = vector.broadcast %cst_17 : f32 to vector<16x128xf32>
    %44 = arith.subf %43, %19 : vector<16x128xf32>
    %45 = arith.mulf %44, %4 : vector<16x128xf32>
    %cst_18 = arith.constant 1.000000e+00 : f32
    %46 = vector.broadcast %cst_18 : f32 to vector<16x128xf32>
    %47 = arith.subf %46, %4 : vector<16x128xf32>
    %48 = arith.mulf %19, %47 : vector<16x128xf32>
    %49 = arith.addf %45, %48 : vector<16x128xf32>
    %50 = arith.mulf %49, %49 : vector<16x128xf32>
    %51 = arith.mulf %42, %50 : vector<16x128xf32>
    %52 = vector.shape_cast %51 : vector<16x128xf32> to vector<2x8x128xf32>
    %cst_19 = arith.constant dense<0.000000e+00> : vector<8x128xf32>
    %53 = vector.multi_reduction <add>, %52, %cst_19 [0] : vector<2x8x128xf32> to vector<8x128xf32>
    %c0_20 = arith.constant 0 : index
    %c0_21 = arith.constant 0 : index
    %c0_22 = arith.constant 0 : index
    %54 = vector.load %arg4[%c0_20, %c0_21, %c0_22] : memref<1x8x128xf32, #tpu.memory_space<vmem>>, vector<1x8x128xf32>
    %55 = vector.shape_cast %54 : vector<1x8x128xf32> to vector<8x128xf32>
    %56 = arith.addf %55, %53 : vector<8x128xf32>
    %c0_23 = arith.constant 0 : index
    %c0_24 = arith.constant 0 : index
    %c0_25 = arith.constant 0 : index
    %57 = vector.load %arg4[%c0_23, %c0_24, %c0_25] : memref<1x8x128xf32, #tpu.memory_space<vmem>>, vector<1x8x128xf32>
    %58 = vector.shape_cast %57 : vector<1x8x128xf32> to vector<8x128xf32>
    %59 = vector.shape_cast %56 : vector<8x128xf32> to vector<1x8x128xf32>
    tpu.vector_store %arg4[%c0_23, %c0_24, %c0_25], %59 {strides = array<i32>} : memref<1x8x128xf32, #tpu.memory_space<vmem>>, vector<1x8x128xf32>,
    return
  }
  func.func @transform_0(%arg0: i32, %arg1: i32) -> (i32, i32) {
    %c1_i32 = arith.constant 1 : i32
    %0 = arith.muli %arg0, %c1_i32 : i32
    %1 = arith.addi %0, %arg1 : i32
    %c0_i32 = arith.constant 0 : i32
    %c0_i32_0 = arith.constant 0 : i32
    return %1, %c0_i32 : i32, i32
  }
  func.func @transform_1(%arg0: i32, %arg1: i32) -> (i32, i32) {
    %c1_i32 = arith.constant 1 : i32
    %0 = arith.muli %arg0, %c1_i32 : i32
    %1 = arith.addi %0, %arg1 : i32
    %c0_i32 = arith.constant 0 : i32
    %c0_i32_0 = arith.constant 0 : i32
    return %1, %c0_i32 : i32, i32
  }
  func.func @transform_2(%arg0: i32, %arg1: i32) -> (i32, i32, i32) {
    %c0_i32 = arith.constant 0 : i32
    %c0_i32_0 = arith.constant 0 : i32
    %c0_i32_1 = arith.constant 0 : i32
    return %arg0, %c0_i32, %c0_i32_0 : i32, i32, i32
  }
}

</mosaic_0001>

<llo_original>
// kernel: tpu_custom_call.1
$region0: #{tpu_custom_call.1}
  #allocation0 [shape = 'u32[]', space=smem, size = 0x4, offset = 0x4, fixed_abs, tag = 'smem constant byte address 0x4 - core index']
  #allocation1 [shape = 'u32[144,128]{1,0:T(1,128)}', space=vmem, size = 0x12000, scoped, tag = 'internal scratch']
  %s0 = inlined_call_operand.hbm [shape: f32[16,128], index: 0, kind: input, shape index: {}]
  %s1 = inlined_call_operand.hbm [shape: f32[16,128], index: 1, kind: input, shape index: {}]
  %s2 = inlined_call_operand.hbm [shape: f32[1,8,128], index: 2, kind: output, shape index: {}]
  %s3 = sld [smem:[#allocation0]]
  $region30: #{tpu_custom_call.1} parent=0
    _
  %s5 = ssub.s32 1, %s3
  %s6 = scalar_select 0, %s5, %s3
  $region1: #{tpu_custom_call.1} parent=0
    #allocation2 [shape = 'u8[8192]{0}', space=vmem, size = 0x2000, scoped, tag = 'input window, operand 0, single buffered']
    #allocation3 [shape = 's32[1]{0}', space=sflag, size = 0x4, scoped, tag = 'scoped memory for tpu_custom_call.1']
    #allocation4 [shape = 's32[1]{0}', space=sflag, size = 0x4, scoped, tag = 'scoped memory for tpu_custom_call.1']
    #allocation5 [shape = 'u8[8192]{0}', space=vmem, size = 0x2000, scoped, tag = 'input window, operand 1, single buffered']
    #allocation6 [shape = 's32[1]{0}', space=sflag, size = 0x4, scoped, tag = 'scoped memory for tpu_custom_call.1']
    #allocation7 [shape = 'u8[4096]{0}', space=vmem, size = 0x1000, scoped, tag = 'output window, operand 0, single buffered']
    %7 = vsyncpa [#allocation3], 0
    %8 = vsyncpa [#allocation6], 0
    %9 = vsyncpa [#allocation4], 0
    // Predicated region
    $region2: #{tpu_custom_call.1} parent=1 // pred_check
      _
    $region3: #{tpu_custom_call.1} parent=1 // pred_check_branch
      %11 = sbr.rel (0) target = $region5
    $region4: #{tpu_custom_call.1} parent=1 // pred_region
      %s12 = sadd.s32 0, 0
      %s13 = smul.u32 2, %s12
      %s15 = ssub.s32 256, 256
      %16 = vsyncadd [#allocation3], %s15
      %s17 = smul.addr %s13, 128
      %s18 = scalar_lea.hbm %s0, %s17
      %s19 = sshll.u32 [#allocation2], 4
      %s20 = int_to_ptr.vmem [resolvable:$true] %s19
      %25 = dma.hbm_to_vmem [thread:$0]  %s18, 256, %s20, [#allocation3], 128, 128, 8
    $region5: #{tpu_custom_call.1} parent=1 // pred_fallthru
      _
    // Predicated region
    $region6: #{tpu_custom_call.1} parent=1 // pred_check
      _
    $region7: #{tpu_custom_call.1} parent=1 // pred_check_branch
      %27 = sbr.rel (0) target = $region9
    $region8: #{tpu_custom_call.1} parent=1 // pred_region
      %s28 = sadd.s32 0, 0
      %s29 = smul.u32 2, %s28
      %s31 = ssub.s32 256, 256
      %32 = vsyncadd [#allocation6], %s31
      %s33 = smul.addr %s29, 128
      %s34 = scalar_lea.hbm %s1, %s33
      %s35 = sshll.u32 [#allocation5], 4
      %s36 = int_to_ptr.vmem [resolvable:$true] %s35
      %41 = dma.hbm_to_vmem [thread:$0]  %s34, 256, %s36, [#allocation6], 128, 128, 8
    $region9: #{tpu_custom_call.1} parent=1 // pred_fallthru
      _
    // Predicated region
    $region10: #{tpu_custom_call.1} parent=1 // pred_check
      _
    $region11: #{tpu_custom_call.1} parent=1 // pred_check_branch
      %43 = sbr.rel (0) target = $region13
    $region12: #{tpu_custom_call.1} parent=1 // pred_region
      %44 = dma.done [#allocation3], 256
    $region13: #{tpu_custom_call.1} parent=1 // pred_fallthru
      _
    // Predicated region
    $region14: #{tpu_custom_call.1} parent=1 // pred_check
      _
    $region15: #{tpu_custom_call.1} parent=1 // pred_check_branch
      %46 = sbr.rel (0) target = $region17
    $region16: #{tpu_custom_call.1} parent=1 // pred_region
      %47 = dma.done [#allocation6], 256
    $region17: #{tpu_custom_call.1} parent=1 // pred_fallthru
      _
    %s48 = sadd.s32 0, 0
    %s49 = smul.u32 2, %s48
    %s50 = sadd.s32 0, 0
    %s51 = smul.u32 2, %s50
    %p52 = scmp.eq.s32.totalorder 0, 0
    // Predicated region
    $region18: #{tpu_custom_call.1} parent=1 // pred_check
      %p53 = pneg %p52
    $region19: #{tpu_custom_call.1} parent=1 // pred_check_branch
      %55 = sbr.rel (%p53) target = $region21
    $region20: #{tpu_custom_call.1} parent=1 // pred_region
      %56 = vst [vmem:[#allocation7] sm:$0xff] 0.0
    $region21: #{tpu_custom_call.1} parent=1 // pred_fallthru
      _
    %v57 = vld [vmem:[#allocation2] sm:$0xff]
    %v58 = vld [vmem:[#allocation2 + $0x8] sm:$0xff]
    %v59 = vld [vmem:[#allocation5] sm:$0xff]
    %v60 = vld [vmem:[#allocation5 + $0x8] sm:$0xff]
    %v61 = vand.u32 2147483647, %v57
    %v62 = vand.u32 2147483647, %v58
    %v63 = vsub.f32 0.0, %v61
    %v64 = vsub.f32 0.0, %v62
    %v65 = vmul.f32 %v63, 1.442695
    %v66 = vpow.pop %v65
    %v67 = vmul.f32 %v64, 1.442695
    %v68 = vpow.pop %v67
    %v69 = vadd.f32 %v66, 1.0
    %v70 = vadd.f32 %v68, 1.0
    %v71 = vlog2.pop %v69
    %v72 = vmul.f32 %v71, 0.6931472
    %v73 = vlog2.pop %v70
    %v74 = vmul.f32 %v73, 0.6931472
    %v75 = vrcp.pop %v69
    %v76 = vmul.f32 1.0, %v75
    %v77 = vrcp.pop %v70
    %v78 = vmul.f32 1.0, %v77
    %vm79 = vcmp.ge.f32.partialorder %v57, 0.0
    %vm80 = vcmp.ge.f32.partialorder %v58, 0.0
    %v81 = vmul.f32 %v66, %v76
    %v82 = vmul.f32 %v68, %v78
    %v83 = vsel %vm79, %v76, %v81
    %v84 = vsel %vm80, %v78, %v82
    %v85 = vmin.f32 %v57, 0.0
    %v86 = vmin.f32 %v58, 0.0
    %v87 = vsub.f32 %v85, %v72
    %v88 = vsub.f32 %v86, %v74
    %v89 = vmax.f32 %v57, 0.0
    %v90 = vmax.f32 %v58, 0.0
    %v91 = vsub.f32 0.0, %v89
    %v92 = vsub.f32 0.0, %v90
    %v93 = vsub.f32 %v91, %v72
    %v94 = vsub.f32 %v92, %v74
    %v95 = vmax.f32 %v87, -100.0
    %v96 = vmax.f32 %v88, -100.0
    %v97 = vmax.f32 %v93, -100.0
    %v98 = vmax.f32 %v94, -100.0
    %vm99 = vcmp.ge.f32.partialorder %v83, 1.0
    %vm100 = vcmp.ge.f32.partialorder %v84, 1.0
    %v101 = vsel %vm99, -100.0, %v97
    %v102 = vsel %vm100, -100.0, %v98
    %v103 = vmul.f32 %v59, %v95
    %v104 = vmul.f32 %v60, %v96
    %v105 = vsub.f32 1.0, %v59
    %v106 = vsub.f32 1.0, %v60
    %v107 = vmul.f32 %v105, %v101
    %v108 = vmul.f32 %v106, %v102
    %v109 = vadd.f32 %v103, %v107
    %v110 = vadd.f32 %v104, %v108
    %v111 = vsub.f32 0.0, %v109
    %v112 = vsub.f32 0.0, %v110
    %v113 = vsub.f32 1.0, %v83
    %v114 = vsub.f32 1.0, %v84
    %v115 = vmul.f32 %v113, %v59
    %v116 = vmul.f32 %v114, %v60
    %v117 = vmul.f32 %v83, %v105
    %v118 = vmul.f32 %v84, %v106
    %v119 = vadd.f32 %v115, %v117
    %v120 = vadd.f32 %v116, %v118
    %v121 = vmul.f32 %v119, %v119
    %v122 = vmul.f32 %v120, %v120
    %v123 = vmul.f32 %v111, %v121
    %v124 = vmul.f32 %v112, %v122
    %v125 = vadd.f32 %v123, %v124
    %v126 = vld [vmem:[#allocation7] sm:$0xff]
    %v127 = vadd.f32 %v126, %v125
    %128 = vst [vmem:[#allocation7] sm:$0xff] %v127
    // Predicated region
    $region22: #{tpu_custom_call.1} parent=1 // pred_check
      _
    $region23: #{tpu_custom_call.1} parent=1 // pred_check_branch
      %130 = sbr.rel (0) target = $region25
    $region24: #{tpu_custom_call.1} parent=1 // pred_region
      %s132 = ssub.s32 128, 128
      %133 = vsyncadd [#allocation4], %s132
      %s135 = sshll.u32 [#allocation7], 4
      %s136 = int_to_ptr.vmem [resolvable:$true] %s135
      %138 = dma.vmem_to_hbm [thread:$0]  %s136, 128, %s2, [#allocation4]
    $region25: #{tpu_custom_call.1} parent=1 // pred_fallthru
      _
    // Predicated region
    $region26: #{tpu_custom_call.1} parent=1 // pred_check
      _
    $region27: #{tpu_custom_call.1} parent=1 // pred_check_branch
      %140 = sbr.rel (0) target = $region29
    $region28: #{tpu_custom_call.1} parent=1 // pred_region
      %141 = dma.done [#allocation4], 128
    $region29: #{tpu_custom_call.1} parent=1 // pred_fallthru
      _
    %142 = vsyncpa [#allocation3], 1
    %143 = vsyncpa [#allocation6], 1
    %144 = vsyncpa [#allocation4], 1

</llo_original>
